<compile_context>
chip_gen: v7x
topology: tpu7x:2x2x1
jax: 0.10.0
libtpu: 0.0.40
codegen_flags: <defaults>
</compile_context>

<pallas_src>
import math

import jax
import jax.numpy as jnp
from jax.experimental import pallas as pl
from jax.experimental.pallas import tpu as pltpu


def _round_up(x, m):
    return -(-x // m) * m


def _cdiv(a, b):
    return -(-a // b)


def _tpu_generation():
    """Return (num_tensorcores_per_device, vmem_capacity_bytes_per_core)."""
    num_tc = 1
    vmem_cap = 128 * 1024 * 1024                     # v5e / v6e physical VMEM
    try:
        info = pltpu.get_tpu_info()
        cap = getattr(info, "vmem_capacity_bytes", None)
        if cap:
            vmem_cap = int(cap)
    except Exception:
        pass
    try:
        kind = (jax.devices()[0].device_kind or "").lower()
    except Exception:
        kind = ""
    if "7" in kind:                                  # v7x: 2 TCs/chip, 64 MiB VMEM/TC
        num_tc = 2
        vmem_cap = min(vmem_cap, 64 * 1024 * 1024)
    return num_tc, vmem_cap


def _choose_tiling(fr, bytes_per_col, feature_tile, requested_splits,
                   max_block_bytes):
    """Pick (tf, num_splits, kb, nb): lane tile, feature splits, blocks per
    split, total blocks.  Invariants: every block except possibly the globally
    last one is full, and nb == num_splits * kb (no clamped duplicates)."""
    max_tf = max(128, (max_block_bytes // bytes_per_col // 128) * 128)
    if feature_tile is None:
        target_step_bytes = 16 * 1024 * 1024         # both inputs, one buffer slot
        tf0 = target_step_bytes // bytes_per_col
    else:
        tf0 = int(feature_tile)
    tf0 = max(128, (tf0 // 128) * 128)
    tf0 = min(tf0, max_tf)

    if tf0 >= fr:
        return fr, 1, 1, 1                           # one full-width block

    nb = _cdiv(fr, tf0)
    num_splits = max(1, min(int(requested_splits), nb))
    if num_splits > 1:
        # Round the block count UP to a multiple of num_splits by shrinking the
        # tile, so no split gets an empty / clamped-duplicate block (no
        # redundant HBM re-read; only the single true last block can be ragged).
        nb_rounded = _cdiv(nb, num_splits) * num_splits
        tf = min(max(128, _round_up(_cdiv(fr, nb_rounded), 128)), max_tf)
        nb = _cdiv(fr, tf)
        if nb % num_splits != 0:                     # tiny fr: drop the split
            num_splits = 1
    else:
        tf = tf0
    kb = nb // num_splits
    return tf, num_splits, kb, nb


def _make_dice_kernel(rows, tf, num_splits, kb, valid_tail):
    """rows = packed rows; tf = lane tile; valid_tail = number of valid lanes
    in the globally-last (ragged) block, or None if every block is full."""
    has_ragged = valid_tail is not None

    def kernel(probs_ref, labels_ref, inter_ref, union_ref):
        p_idx = pl.program_id(0)                     # feature split      ("parallel")
        k_idx = pl.program_id(1)                     # block within split ("arbitrary")

        @pl.when(k_idx == 0)
        def _init():
            inter_ref[...] = jnp.zeros_like(inter_ref)
            union_ref[...] = jnp.zeros_like(union_ref)

        def accumulate(valid):
            # In-kernel cast: inputs arrive in native dtype.  torch.round is
            # round-half-to-even, same as jnp.round.
            p = jnp.round(probs_ref[...].astype(jnp.float32))
            l = labels_ref[...].astype(jnp.float32)
            if valid is not None:
                # Mask BOTH operands: out-of-range lanes of the ragged last
                # block hold whatever Pallas left in the VMEM buffer (possibly
                # NaN/garbage), and `union` sums p + l, so both must become 0.
                p = jnp.where(valid, p, 0.0)
                l = jnp.where(valid, l, 0.0)
            # Per-step lane reduce = (tf/128 - 1) VPU vreg adds + one XLU
            # cross-lane reduce; XLU has plenty of slack in this HBM-bound
            # kernel, so a wider (rows, 128) accumulator would not change the
            # roofline (and the reshape it needs is not layout-free on TPU).
            inter_ref[...] += jnp.sum(p * l, axis=1, keepdims=True)
            union_ref[...] += jnp.sum(p + l, axis=1, keepdims=True)

        if has_ragged:
            # Only the single globally-last block is ragged; every other step
            # takes the unmasked fast path (no iota / compare / selects).
            is_tail = jnp.logical_and(p_idx == num_splits - 1, k_idx == kb - 1)

            @pl.when(jnp.logical_not(is_tail))
            def _full_block():
                accumulate(None)

            @pl.when(is_tail)
            def _ragged_block():
                lane = jax.lax.broadcasted_iota(jnp.int32, (rows, tf), 1)
                accumulate(lane < valid_tail)
        else:
            accumulate(None)

    return kernel


def dice_score(probs, labels, *, feature_tile=None, num_feature_splits=None):
    """Pallas equivalent of DiceScore.forward; returns a scalar (f32).

    Host contract: pass probs/labels in their narrowest native dtype
    (bf16 / f32 / bool / int8); the kernel is HBM-bandwidth bound and casts to
    f32 in VMEM, so halving input bytes is a near-linear speedup.
    `feature_tile` (optional) is in packed lane columns; `num_feature_splits`
    defaults to the number of TensorCores (2 on v7x, 1 on v5e/v6e).
    """
    assert probs.shape == labels.shape, (probs.shape, labels.shape)
    bs = probs.shape[0]
    f = math.prod(probs.shape[1:])
    assert f >= 1

    # ---- sublane packing: view (bs, F) as (bs*pack, F/pack) — free,
    # contiguous reshape (row b*pack + j holds chunk j of sample b) -----------
    pack = 1
    if bs < 8:
        for cand in (8, 4, 2):
            if f % cand == 0:
                pack = cand
                break
    rows = bs * pack
    fr = f // pack
    assert fr < 2**31, "per-row feature extent must fit int32 lane indices"

    probs2d = probs.reshape(rows, fr)
    labels2d = labels.reshape(rows, fr)

    # ---- generation-aware tiling / VMEM budget ------------------------------
    num_tc, vmem_cap = _tpu_generation()
    requested_splits = num_tc if num_feature_splits is None else num_feature_splits
    vmem_budget = (vmem_cap * 3) // 4                # headroom vs physical VMEM
    slack = 4 * 1024 * 1024
    rows_pad = _round_up(rows, 8)
    bytes_per_col = rows_pad * (probs2d.dtype.itemsize + labels2d.dtype.itemsize)
    max_block_bytes = max(128 * bytes_per_col, (vmem_budget - slack) // 2)

    tf, num_splits, kb, nb = _choose_tiling(
        fr, bytes_per_col, feature_tile, requested_splits, max_block_bytes)

    # Only the globally-last block can be ragged (guaranteed by _choose_tiling:
    # (nb - 1) * tf < fr and nb == num_splits * kb), so exactly one grid step
    # ever needs the lane mask.
    has_ragged = nb * tf != fr
    valid_tail = (fr - (nb - 1) * tf) if has_ragged else None

    # vmem_limit from the actual double-buffered footprint (2 buffers x both
    # inputs), plus slack, capped at ~3/4 of this generation's physical VMEM.
    block_bytes = rows_pad * _round_up(tf, 128) * (
        probs2d.dtype.itemsize + labels2d.dtype.itemsize)
    vmem_limit = int(min(vmem_budget,
                         max(2 * block_bytes + slack, 16 * 1024 * 1024)))

    kernel = _make_dice_kernel(rows, tf, num_splits, kb, valid_tail)

    in_spec_p = pl.BlockSpec((rows, tf), lambda pi, ki: (0, pi * kb + ki))
    in_spec_l = pl.BlockSpec((rows, tf), lambda pi, ki: (0, pi * kb + ki))
    out_spec_i = pl.BlockSpec((None, rows, 1), lambda pi, ki: (pi, 0, 0))
    out_spec_u = pl.BlockSpec((None, rows, 1), lambda pi, ki: (pi, 0, 0))

    # TODO(synk): on v7x, verify the leading "parallel" axis is actually
    # core-sharded in the compiled binary; if not, switch it to
    # pltpu.CORE_PARALLEL (or an explicit core_map) so both TensorCores stream.
    inter_parts, union_parts = pl.pallas_call(
        kernel,
        out_shape=(jax.ShapeDtypeStruct((num_splits, rows, 1), jnp.float32),
                   jax.ShapeDtypeStruct((num_splits, rows, 1), jnp.float32)),
        grid_spec=pltpu.PrefetchScalarGridSpec(
            num_scalar_prefetch=0,
            grid=(num_splits, kb),
            in_specs=[in_spec_p, in_spec_l],
            out_specs=[out_spec_i, out_spec_u],
        ),
        compiler_params=pltpu.CompilerParams(
            dimension_semantics=("parallel", "arbitrary"),
            vmem_limit_bytes=vmem_limit),
    )(probs2d, labels2d)

    # Tiny O(bs) epilogue: combine splits, regroup packed rows, finish dice.
    inter_b = jnp.sum(inter_parts, axis=(0, 2)).reshape(bs, pack).sum(axis=1)
    union_b = jnp.sum(union_parts, axis=(0, 2)).reshape(bs, pack).sum(axis=1)
    dice = 2.0 * inter_b / jnp.maximum(union_b, 1e-5)
    return jnp.mean(dice)


def _dice_reference(probs, labels):
    """Plain-JAX reference mirroring the PyTorch module."""
    bs = probs.shape[0]
    p = jnp.round(probs.astype(jnp.float32)).reshape(bs, -1)
    l = labels.astype(jnp.float32).reshape(bs, -1)
    inter = jnp.sum(p * l, axis=1)
    union = jnp.sum(p + l, axis=1)
    return jnp.mean(2.0 * inter / jnp.maximum(union, 1e-5))


if __name__ == "__main__":
    key = jax.random.PRNGKey(0)
    keys = jax.random.split(key, 8)

    # Case 1: default tiling -> single full-width block, sublane-packed rows.
    p1 = jax.random.uniform(keys[0], (2, 4, 16, 16), dtype=jnp.float32)
    l1 = (jax.random.uniform(keys[1], (2, 4, 16, 16)) > 0.5).astype(jnp.float32)
    o1 = dice_score(p1, l1)
    jax.block_until_ready(o1)
    r1 = _dice_reference(p1, l1)
    assert jnp.allclose(o1, r1, atol=1e-5, rtol=1e-5), (o1, r1)

    # Case 2: native bf16 probs + forced small tile -> multi-step accumulation
    # and the pl.when-gated ragged-tail mask (only the last block is masked).
    p2 = jax.random.uniform(keys[2], (2, 3, 40, 40),
                            dtype=jnp.float32).astype(jnp.bfloat16)
    l2 = (jax.random.uniform(keys[3], (2, 3, 40, 40)) > 0.5).astype(jnp.float32)
    o2 = dice_score(p2, l2, feature_tile=128)
    jax.block_until_ready(o2)
    r2 = _dice_reference(p2, l2)
    assert jnp.allclose(o2, r2, atol=1e-5, rtol=1e-5), (o2, r2)

    # Case 3: odd feature count -> no sublane packing, lane width < 128.
    p3 = jax.random.uniform(keys[4], (3, 1, 5, 7), dtype=jnp.float32)
    l3 = (jax.random.uniform(keys[5], (3, 1, 5, 7)) > 0.5).astype(jnp.float32)
    o3 = dice_score(p3, l3)
    jax.block_until_ready(o3)
    r3 = _dice_reference(p3, l3)
    assert jnp.allclose(o3, r3, atol=1e-5, rtol=1e-5), (o3, r3)

    # Case 4: explicit 2-way feature split (v7x-style), even block count,
    # no ragged tail -> exercises the multi-split epilogue combine.
    p4 = jax.random.uniform(keys[6], (2, 4, 64, 64), dtype=jnp.float32)
    l4 = (jax.random.uniform(keys[7], (2, 4, 64, 64)) > 0.5).astype(jnp.float32)
    o4 = dice_score(p4, l4, feature_tile=512, num_feature_splits=2)
    jax.block_until_ready(o4)
    r4 = _dice_reference(p4, l4)
    assert jnp.allclose(o4, r4, atol=1e-5, rtol=1e-5), (o4, r4)

    print("KERNEL_OK")
</pallas_src>

<mosaic_0001>
module attributes {stable_mosaic.version = 11 : i64} {
  func.func @kernel(%arg0: i32, %arg1: i32, %arg2: memref<16x128xf32, #tpu.memory_space<vmem>>, %arg3: memref<16x128xf32, #tpu.memory_space<vmem>>, %arg4: memref<1x16x1xf32, #tpu.memory_space<vmem>>, %arg5: memref<1x16x1xf32, #tpu.memory_space<vmem>>) attributes {dimension_semantics = [#tpu.dimension_semantics<parallel>, #tpu.dimension_semantics<arbitrary>], iteration_bounds = array<i64: 1, 1>, scalar_prefetch = 0 : i64, scratch_operands = 0 : i64, tpu.core_type = #tpu.core_type<tc>, window_params = [{transform_indices = @transform_0, window_bounds = array<i64: 16, 128>}, {transform_indices = @transform_1, window_bounds = array<i64: 16, 128>}, {transform_indices = @transform_2, window_bounds = array<i64: 1, 16, 1>}, {transform_indices = @transform_3, window_bounds = array<i64: 1, 16, 1>}]} {
    %c0_i32 = arith.constant 0 : i32
    %0 = arith.cmpi eq, %arg1, %c0_i32 : i32
    %1 = arith.extui %0 : i1 to i32
    %c0_i32_0 = arith.constant 0 : i32
    %2 = arith.cmpi ne, %1, %c0_i32_0 : i32
    scf.if %2 {
      %cst_17 = arith.constant 0.000000e+00 : f32
      %24 = vector.broadcast %cst_17 : f32 to vector<16x1xf32>
      %c0_18 = arith.constant 0 : index
      %c0_19 = arith.constant 0 : index
      %c0_20 = arith.constant 0 : index
      %25 = vector.load %arg4[%c0_18, %c0_19, %c0_20] : memref<1x16x1xf32, #tpu.memory_space<vmem>>, vector<1x16x1xf32>
      %26 = vector.shape_cast %25 : vector<1x16x1xf32> to vector<16x1xf32>
      %27 = vector.shape_cast %24 : vector<16x1xf32> to vector<1x16x1xf32>
      tpu.vector_store %arg4[%c0_18, %c0_19, %c0_20], %27 {strides = array<i32>} : memref<1x16x1xf32, #tpu.memory_space<vmem>>, vector<1x16x1xf32>,
      %cst_21 = arith.constant 0.000000e+00 : f32
      %28 = vector.broadcast %cst_21 : f32 to vector<16x1xf32>
      %c0_22 = arith.constant 0 : index
      %c0_23 = arith.constant 0 : index
      %c0_24 = arith.constant 0 : index
      %29 = vector.load %arg5[%c0_22, %c0_23, %c0_24] : memref<1x16x1xf32, #tpu.memory_space<vmem>>, vector<1x16x1xf32>
      %30 = vector.shape_cast %29 : vector<1x16x1xf32> to vector<16x1xf32>
      %31 = vector.shape_cast %28 : vector<16x1xf32> to vector<1x16x1xf32>
      tpu.vector_store %arg5[%c0_22, %c0_23, %c0_24], %31 {strides = array<i32>} : memref<1x16x1xf32, #tpu.memory_space<vmem>>, vector<1x16x1xf32>,
    } else {
    }
    %c0 = arith.constant 0 : index
    %c0_1 = arith.constant 0 : index
    %3 = vector.load %arg2[%c0, %c0_1] : memref<16x128xf32, #tpu.memory_space<vmem>>, vector<16x128xf32>
    %4 = math.roundeven %3 : vector<16x128xf32>
    %c0_2 = arith.constant 0 : index
    %c0_3 = arith.constant 0 : index
    %5 = vector.load %arg3[%c0_2, %c0_3] : memref<16x128xf32, #tpu.memory_space<vmem>>, vector<16x128xf32>
    %c0_4 = arith.constant 0 : index
    %c0_5 = arith.constant 0 : index
    %c0_6 = arith.constant 0 : index
    %6 = vector.load %arg4[%c0_4, %c0_5, %c0_6] : memref<1x16x1xf32, #tpu.memory_space<vmem>>, vector<1x16x1xf32>
    %7 = vector.shape_cast %6 : vector<1x16x1xf32> to vector<16x1xf32>
    %8 = arith.mulf %4, %5 : vector<16x128xf32>
    %cst = arith.constant dense<0.000000e+00> : vector<16xf32>
    %9 = vector.multi_reduction <add>, %8, %cst [1] : vector<16x128xf32> to vector<16xf32>
    %10 = vector.shape_cast %9 : vector<16xf32> to vector<16x1xf32>
    %11 = arith.addf %7, %10 : vector<16x1xf32>
    %c0_7 = arith.constant 0 : index
    %c0_8 = arith.constant 0 : index
    %c0_9 = arith.constant 0 : index
    %12 = vector.load %arg4[%c0_7, %c0_8, %c0_9] : memref<1x16x1xf32, #tpu.memory_space<vmem>>, vector<1x16x1xf32>
    %13 = vector.shape_cast %12 : vector<1x16x1xf32> to vector<16x1xf32>
    %14 = vector.shape_cast %11 : vector<16x1xf32> to vector<1x16x1xf32>
    tpu.vector_store %arg4[%c0_7, %c0_8, %c0_9], %14 {strides = array<i32>} : memref<1x16x1xf32, #tpu.memory_space<vmem>>, vector<1x16x1xf32>,
    %c0_10 = arith.constant 0 : index
    %c0_11 = arith.constant 0 : index
    %c0_12 = arith.constant 0 : index
    %15 = vector.load %arg5[%c0_10, %c0_11, %c0_12] : memref<1x16x1xf32, #tpu.memory_space<vmem>>, vector<1x16x1xf32>
    %16 = vector.shape_cast %15 : vector<1x16x1xf32> to vector<16x1xf32>
    %17 = arith.addf %4, %5 : vector<16x128xf32>
    %cst_13 = arith.constant dense<0.000000e+00> : vector<16xf32>
    %18 = vector.multi_reduction <add>, %17, %cst_13 [1] : vector<16x128xf32> to vector<16xf32>
    %19 = vector.shape_cast %18 : vector<16xf32> to vector<16x1xf32>
    %20 = arith.addf %16, %19 : vector<16x1xf32>
    %c0_14 = arith.constant 0 : index
    %c0_15 = arith.constant 0 : index
    %c0_16 = arith.constant 0 : index
    %21 = vector.load %arg5[%c0_14, %c0_15, %c0_16] : memref<1x16x1xf32, #tpu.memory_space<vmem>>, vector<1x16x1xf32>
    %22 = vector.shape_cast %21 : vector<1x16x1xf32> to vector<16x1xf32>
    %23 = vector.shape_cast %20 : vector<16x1xf32> to vector<1x16x1xf32>
    tpu.vector_store %arg5[%c0_14, %c0_15, %c0_16], %23 {strides = array<i32>} : memref<1x16x1xf32, #tpu.memory_space<vmem>>, vector<1x16x1xf32>,
    return
  }
  func.func @transform_0(%arg0: i32, %arg1: i32) -> (i32, i32) {
    %c1_i32 = arith.constant 1 : i32
    %0 = arith.muli %arg0, %c1_i32 : i32
    %1 = arith.addi %0, %arg1 : i32
    %c0_i32 = arith.constant 0 : i32
    %c0_i32_0 = arith.constant 0 : i32
    return %c0_i32, %1 : i32, i32
  }
  func.func @transform_1(%arg0: i32, %arg1: i32) -> (i32, i32) {
    %c1_i32 = arith.constant 1 : i32
    %0 = arith.muli %arg0, %c1_i32 : i32
    %1 = arith.addi %0, %arg1 : i32
    %c0_i32 = arith.constant 0 : i32
    %c0_i32_0 = arith.constant 0 : i32
    return %c0_i32, %1 : i32, i32
  }
  func.func @transform_2(%arg0: i32, %arg1: i32) -> (i32, i32, i32) {
    %c0_i32 = arith.constant 0 : i32
    %c0_i32_0 = arith.constant 0 : i32
    %c0_i32_1 = arith.constant 0 : i32
    return %arg0, %c0_i32, %c0_i32_0 : i32, i32, i32
  }
  func.func @transform_3(%arg0: i32, %arg1: i32) -> (i32, i32, i32) {
    %c0_i32 = arith.constant 0 : i32
    %c0_i32_0 = arith.constant 0 : i32
    %c0_i32_1 = arith.constant 0 : i32
    return %arg0, %c0_i32, %c0_i32_0 : i32, i32, i32
  }
}

</mosaic_0001>

<llo_original>
// kernel: tpu_custom_call.1
$region0: #{tpu_custom_call.1}
  #allocation0 [shape = 'u32[]', space=smem, size = 0x4, offset = 0x4, fixed_abs, tag = 'smem constant byte address 0x4 - core index']
  #allocation1 [shape = 'u32[144,128]{1,0:T(1,128)}', space=vmem, size = 0x12000, scoped, tag = 'internal scratch']
  %s0 = inlined_call_operand.hbm [shape: f32[16,128], index: 0, kind: input, shape index: {}]
  %s1 = inlined_call_operand.hbm [shape: f32[16,128], index: 1, kind: input, shape index: {}]
  %s2 = inlined_call_operand.vmem [shape: f32[1,16,1], index: 2, kind: output, shape index: {0}]
  %s3 = inlined_call_operand.vmem [shape: f32[1,16,1], index: 3, kind: output, shape index: {1}]
  %4 = xla_tuple %s2, %s3
  %s5 = sld [smem:[#allocation0]]
  $region38: #{tpu_custom_call.1} parent=0
    _
  %s7 = ssub.s32 1, %s5
  %s8 = scalar_select 0, %s7, %s5
  $region1: #{tpu_custom_call.1} parent=0
    #allocation2 [shape = 'u8[8192]{0}', space=vmem, size = 0x2000, scoped, tag = 'input window, operand 0, single buffered']
    #allocation3 [shape = 's32[1]{0}', space=sflag, size = 0x4, scoped, tag = 'scoped memory for tpu_custom_call.1']
    #allocation4 [shape = 'u8[8192]{0}', space=vmem, size = 0x2000, scoped, tag = 'input window, operand 1, single buffered']
    #allocation5 [shape = 's32[1]{0}', space=sflag, size = 0x4, scoped, tag = 'scoped memory for tpu_custom_call.1']
    %9 = vsyncpa [#allocation3], 0
    %10 = vsyncpa [#allocation5], 0
    // Predicated region
    $region2: #{tpu_custom_call.1} parent=1 // pred_check
      _
    $region3: #{tpu_custom_call.1} parent=1 // pred_check_branch
      %12 = sbr.rel (0) target = $region5
    $region4: #{tpu_custom_call.1} parent=1 // pred_region
      %s13 = sadd.s32 0, 0
      %s15 = ssub.s32 256, 256
      %16 = vsyncadd [#allocation3], %s15
      %s17 = smul.addr %s13, 128
      %s18 = scalar_lea.hbm %s0, %s17
      %s19 = sshll.u32 [#allocation2], 4
      %s20 = int_to_ptr.vmem [resolvable:$true] %s19
      %25 = dma.hbm_to_vmem [thread:$0]  %s18, 256, %s20, [#allocation3], 128, 128, 8
    $region5: #{tpu_custom_call.1} parent=1 // pred_fallthru
      _
    // Predicated region
    $region6: #{tpu_custom_call.1} parent=1 // pred_check
      _
    $region7: #{tpu_custom_call.1} parent=1 // pred_check_branch
      %27 = sbr.rel (0) target = $region9
    $region8: #{tpu_custom_call.1} parent=1 // pred_region
      %s28 = sadd.s32 0, 0
      %s30 = ssub.s32 256, 256
      %31 = vsyncadd [#allocation5], %s30
      %s32 = smul.addr %s28, 128
      %s33 = scalar_lea.hbm %s1, %s32
      %s34 = sshll.u32 [#allocation4], 4
      %s35 = int_to_ptr.vmem [resolvable:$true] %s34
      %40 = dma.hbm_to_vmem [thread:$0]  %s33, 256, %s35, [#allocation5], 128, 128, 8
    $region9: #{tpu_custom_call.1} parent=1 // pred_fallthru
      _
    // Predicated region
    $region10: #{tpu_custom_call.1} parent=1 // pred_check
      _
    $region11: #{tpu_custom_call.1} parent=1 // pred_check_branch
      %42 = sbr.rel (0) target = $region13
    $region12: #{tpu_custom_call.1} parent=1 // pred_region
      %43 = dma.done [#allocation3], 256
    $region13: #{tpu_custom_call.1} parent=1 // pred_fallthru
      _
    // Predicated region
    $region14: #{tpu_custom_call.1} parent=1 // pred_check
      _
    $region15: #{tpu_custom_call.1} parent=1 // pred_check_branch
      %45 = sbr.rel (0) target = $region17
    $region16: #{tpu_custom_call.1} parent=1 // pred_region
      %46 = dma.done [#allocation5], 256
    $region17: #{tpu_custom_call.1} parent=1 // pred_fallthru
      _
    %s47 = sadd.s32 0, 0
    %s48 = sadd.s32 0, 0
    %p49 = scmp.eq.s32.totalorder 0, 0
    // Predicated region
    $region18: #{tpu_custom_call.1} parent=1 // pred_check
      %p50 = pneg %p49
    $region19: #{tpu_custom_call.1} parent=1 // pred_check_branch
      %52 = sbr.rel (%p50) target = $region21
    $region20: #{tpu_custom_call.1} parent=1 // pred_region
      %vm53 = vcmask 7168
      %54 = vst.msk [vmem:[%s2] sm:$0xff] %vm53, 0.0
      %55 = vst.msk [vmem:[%s2 + $0x8] sm:$0xff] %vm53, 0.0
      %56 = vst.msk [vmem:[%s3] sm:$0xff] %vm53, 0.0
      %57 = vst.msk [vmem:[%s3 + $0x8] sm:$0xff] %vm53, 0.0
    $region21: #{tpu_custom_call.1} parent=1 // pred_fallthru
      _
    %v58 = vld [vmem:[#allocation2] sm:$0xff]
    %v59 = vld [vmem:[#allocation2 + $0x8] sm:$0xff]
    %v60 = vround.ne.pseudo %v58
    %v61 = vround.ne.pseudo %v59
    %v62 = vld [vmem:[#allocation4] sm:$0xff]
    %v63 = vld [vmem:[#allocation4 + $0x8] sm:$0xff]
    %v64 = vld [vmem:[%s2] sm:$0xff]
    %v65 = vld [vmem:[%s2 + $0x8] sm:$0xff]
    %v66 = vmul.f32 %v60, %v62
    %v67 = vmul.f32 %v61, %v63
    %68 = vadd.xlane.f32.xlu0 %v66
    %v69 = vpop.xlane.xlu0 %68
    %70 = vadd.xlane.f32.xlu0 %v67
    %v71 = vpop.xlane.xlu0 %70
    %v72 = vadd.f32 %v64, %v69
    %v73 = vadd.f32 %v65, %v71
    %vm74 = vcmask 7168
    %75 = vst.msk [vmem:[%s2] sm:$0xff] %vm74, %v72
    %76 = vst.msk [vmem:[%s2 + $0x8] sm:$0xff] %vm74, %v73
    %v77 = vld [vmem:[%s3] sm:$0xff]
    %v78 = vld [vmem:[%s3 + $0x8] sm:$0xff]
    %v79 = vadd.f32 %v60, %v62
    %v80 = vadd.f32 %v61, %v63
    %81 = vadd.xlane.f32.xlu0 %v79
    %v82 = vpop.xlane.xlu0 %81
    %83 = vadd.xlane.f32.xlu0 %v80
    %v84 = vpop.xlane.xlu0 %83
    %v85 = vadd.f32 %v77, %v82
    %v86 = vadd.f32 %v78, %v84
    %87 = vst.msk [vmem:[%s3] sm:$0xff] %vm74, %v85
    %88 = vst.msk [vmem:[%s3 + $0x8] sm:$0xff] %vm74, %v86
    // Predicated region
    $region22: #{tpu_custom_call.1} parent=1 // pred_check
      _
    $region23: #{tpu_custom_call.1} parent=1 // pred_check_branch
      %90 = sbr.rel (0) target = $region25
    $region24: #{tpu_custom_call.1} parent=1 // pred_region
      _
    $region25: #{tpu_custom_call.1} parent=1 // pred_fallthru
      _
    // Predicated region
    $region26: #{tpu_custom_call.1} parent=1 // pred_check
      _
    $region27: #{tpu_custom_call.1} parent=1 // pred_check_branch
      %92 = sbr.rel (0) target = $region29
    $region28: #{tpu_custom_call.1} parent=1 // pred_region
      _
    $region29: #{tpu_custom_call.1} parent=1 // pred_fallthru
      _
    // Predicated region
    $region30: #{tpu_custom_call.1} parent=1 // pred_check
      _
    $region31: #{tpu_custom_call.1} parent=1 // pred_check_branch
      %94 = sbr.rel (0) target = $region33
    $region32: #{tpu_custom_call.1} parent=1 // pred_region
      _
    $region33: #{tpu_custom_call.1} parent=1 // pred_fallthru
      _
    // Predicated region
    $region34: #{tpu_custom_call.1} parent=1 // pred_check
      _
    $region35: #{tpu_custom_call.1} parent=1 // pred_check_branch
      %96 = sbr.rel (0) target = $region37
    $region36: #{tpu_custom_call.1} parent=1 // pred_region
      _
    $region37: #{tpu_custom_call.1} parent=1 // pred_fallthru
      _
    %97 = vsyncpa [#allocation3], 1
    %98 = vsyncpa [#allocation5], 1

</llo_original>
